<compile_context>
chip_gen: v7x
topology: tpu7x:2x2x1
jax: 0.10.0
libtpu: 0.0.40
codegen_flags: <defaults>
</compile_context>

<pallas_src>
import jax
import jax.numpy as jnp
from jax.experimental import pallas as pl
from jax.experimental.pallas import tpu as pltpu

D_IN, H, D_OUT = 3, 9, 1
SUB = 8  # sublanes per block (batch rows per lane-column)


def _mlp_kernel(x_ref, w1_ref, b1_ref, w2_ref, b2_ref, o_ref):
    # x_ref: (3, 8, L) VMEM block -- 3 feature planes, each a dense (8, L) tile
    #        covering 8*L batch rows.
    # w1_ref (3,9), b1_ref (9,), w2_ref (9,), b2_ref (1,): SMEM scalars.
    # o_ref: (8, L) VMEM block, same batch tiling as x.
    x0 = x_ref[0]  # (8, L)
    x1 = x_ref[1]
    x2 = x_ref[2]

    acc = jnp.zeros_like(x0)
    for j in range(H):  # unrolled at trace time: 36 VPU FMAs + 9 ReLUs total
        h = (x0 * w1_ref[0, j]
             + x1 * w1_ref[1, j]
             + x2 * w1_ref[2, j]
             + b1_ref[j])
        h = jnp.maximum(h, 0.0)          # ReLU
        acc = acc + h * w2_ref[j]        # Linear(9, 1) accumulation
    o_ref[...] = acc + b2_ref[0]


def _round_up(a, b):
    return (a + b - 1) // b * b


def _choose_lane(n):
    # rows per grid step = SUB * lane; ~4096 rows/step for large batches,
    # shrink toward 128 lanes so tiny batches aren't padded to thousands of rows.
    lane = 512
    while lane > 128 and n <= SUB * (lane // 2):
        lane //= 2
    return lane


def bpnn_forward(x, w1, b1, w2, b2):
    """x: (N, 3) float32. Returns (N, 1) float32, matching BPNNModel.forward."""
    n = x.shape[0]
    lane = _choose_lane(n)
    rows_per_block = SUB * lane
    n_pad = _round_up(n, rows_per_block)
    n_groups = n_pad // lane           # multiple of SUB by construction
    grid = (n_pad // rows_per_block,)

    # --- glue: transpose to batch-on-lanes; pad only the batch remainder ----
    xt = x.astype(jnp.float32).T                      # (3, N)
    if n_pad != n:
        xt = jnp.pad(xt, ((0, 0), (0, n_pad - n)))    # zero-pad batch tail
    xr = xt.reshape(D_IN, n_groups, lane)             # contiguous reshape

    out_r = pl.pallas_call(
        _mlp_kernel,
        out_shape=jax.ShapeDtypeStruct((n_groups, lane), jnp.float32),
        grid_spec=pltpu.PrefetchScalarGridSpec(
            num_scalar_prefetch=0,
            grid=grid,
            in_specs=[
                # streamed batch blocks: (3 features, 8 sublanes, L lanes)
                pl.BlockSpec((D_IN, SUB, lane), lambda i: (0, i, 0)),
                # tiny resident parameters in SMEM (no per-step weight DMA)
                pl.BlockSpec(memory_space=pltpu.MemorySpace.SMEM),  # w1 (3,9)
                pl.BlockSpec(memory_space=pltpu.MemorySpace.SMEM),  # b1 (9,)
                pl.BlockSpec(memory_space=pltpu.MemorySpace.SMEM),  # w2 (9,)
                pl.BlockSpec(memory_space=pltpu.MemorySpace.SMEM),  # b2 (1,)
            ],
            out_specs=pl.BlockSpec((SUB, lane), lambda i: (i, 0)),
        ),
        compiler_params=pltpu.CompilerParams(
            dimension_semantics=("parallel",)),  # shard batch over v7x's 2 TCs
    )(xr,
      jnp.asarray(w1, jnp.float32),
      jnp.asarray(b1, jnp.float32).reshape(-1),
      jnp.asarray(w2, jnp.float32).reshape(-1),
      jnp.asarray(b2, jnp.float32).reshape(-1))

    # contiguous un-tile + slice off batch padding -> (N, 1)
    return out_r.reshape(n_pad)[:n].reshape(n, D_OUT)


def init_params(key):
    """Deterministic PyTorch-style (uniform +/- 1/sqrt(fan_in)) init."""
    k1, k2, k3, k4 = jax.random.split(key, 4)
    bound1 = 1.0 / jnp.sqrt(D_IN)
    bound2 = 1.0 / jnp.sqrt(H)
    w1 = jax.random.uniform(k1, (D_IN, H), jnp.float32, -bound1, bound1)
    b1 = jax.random.uniform(k2, (H,), jnp.float32, -bound1, bound1)
    w2 = jax.random.uniform(k3, (H, D_OUT), jnp.float32, -bound2, bound2)
    b2 = jax.random.uniform(k4, (D_OUT,), jnp.float32, -bound2, bound2)
    return w1, b1, w2, b2


if __name__ == "__main__":
    key = jax.random.PRNGKey(0)
    kx, kp = jax.random.split(key)
    N = 8
    x = jax.random.normal(kx, (N, D_IN), jnp.float32)
    w1, b1, w2, b2 = init_params(kp)

    out = bpnn_forward(x, w1, b1, w2, b2)
    out = jax.block_until_ready(out)

    # reference check in plain JAX
    ref = jnp.maximum(x @ w1 + b1, 0.0) @ w2 + b2
    assert out.shape == (N, D_OUT)
    assert jnp.allclose(out, ref, atol=1e-5, rtol=1e-5)
    print("KERNEL_OK")
</pallas_src>

<mosaic_0001>
module attributes {stable_mosaic.version = 11 : i64} {
  func.func @_mlp_kernel(%arg0: i32, %arg1: memref<3x8x128xf32, #tpu.memory_space<vmem>>, %arg2: memref<3x9xf32, #tpu.memory_space<smem>>, %arg3: memref<9xf32, #tpu.memory_space<smem>>, %arg4: memref<9xf32, #tpu.memory_space<smem>>, %arg5: memref<1xf32, #tpu.memory_space<smem>>, %arg6: memref<8x128xf32, #tpu.memory_space<vmem>>) attributes {dimension_semantics = [#tpu.dimension_semantics<parallel>], iteration_bounds = array<i64: 1>, scalar_prefetch = 0 : i64, scratch_operands = 0 : i64, tpu.core_type = #tpu.core_type<tc>, window_params = [{transform_indices = @transform_0, window_bounds = array<i64: 3, 8, 128>}, {transform_indices = @transform_1, window_bounds = array<i64: 3, 9>}, {transform_indices = @transform_2, window_bounds = array<i64: 9>}, {transform_indices = @transform_3, window_bounds = array<i64: 9>}, {transform_indices = @transform_4, window_bounds = array<i64: 1>}, {transform_indices = @transform_5, window_bounds = array<i64: 8, 128>}]} {
    %c0 = arith.constant 0 : index
    %c0_0 = arith.constant 0 : index
    %c0_1 = arith.constant 0 : index
    %0 = vector.load %arg1[%c0, %c0_0, %c0_1] : memref<3x8x128xf32, #tpu.memory_space<vmem>>, vector<1x8x128xf32>
    %1 = vector.shape_cast %0 : vector<1x8x128xf32> to vector<8x128xf32>
    %c1 = arith.constant 1 : index
    %c0_2 = arith.constant 0 : index
    %c0_3 = arith.constant 0 : index
    %2 = vector.load %arg1[%c1, %c0_2, %c0_3] : memref<3x8x128xf32, #tpu.memory_space<vmem>>, vector<1x8x128xf32>
    %3 = vector.shape_cast %2 : vector<1x8x128xf32> to vector<8x128xf32>
    %c2 = arith.constant 2 : index
    %c0_4 = arith.constant 0 : index
    %c0_5 = arith.constant 0 : index
    %4 = vector.load %arg1[%c2, %c0_4, %c0_5] : memref<3x8x128xf32, #tpu.memory_space<vmem>>, vector<1x8x128xf32>
    %5 = vector.shape_cast %4 : vector<1x8x128xf32> to vector<8x128xf32>
    %cst = arith.constant 0.000000e+00 : f32
    %6 = vector.broadcast %cst : f32 to vector<8x128xf32>
    %c0_6 = arith.constant 0 : index
    %c0_7 = arith.constant 0 : index
    %7 = memref.load %arg2[%c0_6, %c0_7] : memref<3x9xf32, #tpu.memory_space<smem>>
    %8 = vector.broadcast %7 : f32 to vector<8x128xf32>
    %9 = arith.mulf %1, %8 : vector<8x128xf32>
    %c1_8 = arith.constant 1 : index
    %c0_9 = arith.constant 0 : index
    %10 = memref.load %arg2[%c1_8, %c0_9] : memref<3x9xf32, #tpu.memory_space<smem>>
    %11 = vector.broadcast %10 : f32 to vector<8x128xf32>
    %12 = arith.mulf %3, %11 : vector<8x128xf32>
    %13 = arith.addf %9, %12 : vector<8x128xf32>
    %c2_10 = arith.constant 2 : index
    %c0_11 = arith.constant 0 : index
    %14 = memref.load %arg2[%c2_10, %c0_11] : memref<3x9xf32, #tpu.memory_space<smem>>
    %15 = vector.broadcast %14 : f32 to vector<8x128xf32>
    %16 = arith.mulf %5, %15 : vector<8x128xf32>
    %17 = arith.addf %13, %16 : vector<8x128xf32>
    %c0_12 = arith.constant 0 : index
    %18 = memref.load %arg3[%c0_12] : memref<9xf32, #tpu.memory_space<smem>>
    %19 = vector.broadcast %18 : f32 to vector<8x128xf32>
    %20 = arith.addf %17, %19 : vector<8x128xf32>
    %cst_13 = arith.constant 0.000000e+00 : f32
    %21 = vector.broadcast %cst_13 : f32 to vector<8x128xf32>
    %22 = arith.maximumf %20, %21 : vector<8x128xf32>
    %c0_14 = arith.constant 0 : index
    %23 = memref.load %arg4[%c0_14] : memref<9xf32, #tpu.memory_space<smem>>
    %24 = vector.broadcast %23 : f32 to vector<8x128xf32>
    %25 = arith.mulf %22, %24 : vector<8x128xf32>
    %26 = arith.addf %6, %25 : vector<8x128xf32>
    %c0_15 = arith.constant 0 : index
    %c1_16 = arith.constant 1 : index
    %27 = memref.load %arg2[%c0_15, %c1_16] : memref<3x9xf32, #tpu.memory_space<smem>>
    %28 = vector.broadcast %27 : f32 to vector<8x128xf32>
    %29 = arith.mulf %1, %28 : vector<8x128xf32>
    %c1_17 = arith.constant 1 : index
    %c1_18 = arith.constant 1 : index
    %30 = memref.load %arg2[%c1_17, %c1_18] : memref<3x9xf32, #tpu.memory_space<smem>>
    %31 = vector.broadcast %30 : f32 to vector<8x128xf32>
    %32 = arith.mulf %3, %31 : vector<8x128xf32>
    %33 = arith.addf %29, %32 : vector<8x128xf32>
    %c2_19 = arith.constant 2 : index
    %c1_20 = arith.constant 1 : index
    %34 = memref.load %arg2[%c2_19, %c1_20] : memref<3x9xf32, #tpu.memory_space<smem>>
    %35 = vector.broadcast %34 : f32 to vector<8x128xf32>
    %36 = arith.mulf %5, %35 : vector<8x128xf32>
    %37 = arith.addf %33, %36 : vector<8x128xf32>
    %c1_21 = arith.constant 1 : index
    %38 = memref.load %arg3[%c1_21] : memref<9xf32, #tpu.memory_space<smem>>
    %39 = vector.broadcast %38 : f32 to vector<8x128xf32>
    %40 = arith.addf %37, %39 : vector<8x128xf32>
    %cst_22 = arith.constant 0.000000e+00 : f32
    %41 = vector.broadcast %cst_22 : f32 to vector<8x128xf32>
    %42 = arith.maximumf %40, %41 : vector<8x128xf32>
    %c1_23 = arith.constant 1 : index
    %43 = memref.load %arg4[%c1_23] : memref<9xf32, #tpu.memory_space<smem>>
    %44 = vector.broadcast %43 : f32 to vector<8x128xf32>
    %45 = arith.mulf %42, %44 : vector<8x128xf32>
    %46 = arith.addf %26, %45 : vector<8x128xf32>
    %c0_24 = arith.constant 0 : index
    %c2_25 = arith.constant 2 : index
    %47 = memref.load %arg2[%c0_24, %c2_25] : memref<3x9xf32, #tpu.memory_space<smem>>
    %48 = vector.broadcast %47 : f32 to vector<8x128xf32>
    %49 = arith.mulf %1, %48 : vector<8x128xf32>
    %c1_26 = arith.constant 1 : index
    %c2_27 = arith.constant 2 : index
    %50 = memref.load %arg2[%c1_26, %c2_27] : memref<3x9xf32, #tpu.memory_space<smem>>
    %51 = vector.broadcast %50 : f32 to vector<8x128xf32>
    %52 = arith.mulf %3, %51 : vector<8x128xf32>
    %53 = arith.addf %49, %52 : vector<8x128xf32>
    %c2_28 = arith.constant 2 : index
    %c2_29 = arith.constant 2 : index
    %54 = memref.load %arg2[%c2_28, %c2_29] : memref<3x9xf32, #tpu.memory_space<smem>>
    %55 = vector.broadcast %54 : f32 to vector<8x128xf32>
    %56 = arith.mulf %5, %55 : vector<8x128xf32>
    %57 = arith.addf %53, %56 : vector<8x128xf32>
    %c2_30 = arith.constant 2 : index
    %58 = memref.load %arg3[%c2_30] : memref<9xf32, #tpu.memory_space<smem>>
    %59 = vector.broadcast %58 : f32 to vector<8x128xf32>
    %60 = arith.addf %57, %59 : vector<8x128xf32>
    %cst_31 = arith.constant 0.000000e+00 : f32
    %61 = vector.broadcast %cst_31 : f32 to vector<8x128xf32>
    %62 = arith.maximumf %60, %61 : vector<8x128xf32>
    %c2_32 = arith.constant 2 : index
    %63 = memref.load %arg4[%c2_32] : memref<9xf32, #tpu.memory_space<smem>>
    %64 = vector.broadcast %63 : f32 to vector<8x128xf32>
    %65 = arith.mulf %62, %64 : vector<8x128xf32>
    %66 = arith.addf %46, %65 : vector<8x128xf32>
    %c0_33 = arith.constant 0 : index
    %c3 = arith.constant 3 : index
    %67 = memref.load %arg2[%c0_33, %c3] : memref<3x9xf32, #tpu.memory_space<smem>>
    %68 = vector.broadcast %67 : f32 to vector<8x128xf32>
    %69 = arith.mulf %1, %68 : vector<8x128xf32>
    %c1_34 = arith.constant 1 : index
    %c3_35 = arith.constant 3 : index
    %70 = memref.load %arg2[%c1_34, %c3_35] : memref<3x9xf32, #tpu.memory_space<smem>>
    %71 = vector.broadcast %70 : f32 to vector<8x128xf32>
    %72 = arith.mulf %3, %71 : vector<8x128xf32>
    %73 = arith.addf %69, %72 : vector<8x128xf32>
    %c2_36 = arith.constant 2 : index
    %c3_37 = arith.constant 3 : index
    %74 = memref.load %arg2[%c2_36, %c3_37] : memref<3x9xf32, #tpu.memory_space<smem>>
    %75 = vector.broadcast %74 : f32 to vector<8x128xf32>
    %76 = arith.mulf %5, %75 : vector<8x128xf32>
    %77 = arith.addf %73, %76 : vector<8x128xf32>
    %c3_38 = arith.constant 3 : index
    %78 = memref.load %arg3[%c3_38] : memref<9xf32, #tpu.memory_space<smem>>
    %79 = vector.broadcast %78 : f32 to vector<8x128xf32>
    %80 = arith.addf %77, %79 : vector<8x128xf32>
    %cst_39 = arith.constant 0.000000e+00 : f32
    %81 = vector.broadcast %cst_39 : f32 to vector<8x128xf32>
    %82 = arith.maximumf %80, %81 : vector<8x128xf32>
    %c3_40 = arith.constant 3 : index
    %83 = memref.load %arg4[%c3_40] : memref<9xf32, #tpu.memory_space<smem>>
    %84 = vector.broadcast %83 : f32 to vector<8x128xf32>
    %85 = arith.mulf %82, %84 : vector<8x128xf32>
    %86 = arith.addf %66, %85 : vector<8x128xf32>
    %c0_41 = arith.constant 0 : index
    %c4 = arith.constant 4 : index
    %87 = memref.load %arg2[%c0_41, %c4] : memref<3x9xf32, #tpu.memory_space<smem>>
    %88 = vector.broadcast %87 : f32 to vector<8x128xf32>
    %89 = arith.mulf %1, %88 : vector<8x128xf32>
    %c1_42 = arith.constant 1 : index
    %c4_43 = arith.constant 4 : index
    %90 = memref.load %arg2[%c1_42, %c4_43] : memref<3x9xf32, #tpu.memory_space<smem>>
    %91 = vector.broadcast %90 : f32 to vector<8x128xf32>
    %92 = arith.mulf %3, %91 : vector<8x128xf32>
    %93 = arith.addf %89, %92 : vector<8x128xf32>
    %c2_44 = arith.constant 2 : index
    %c4_45 = arith.constant 4 : index
    %94 = memref.load %arg2[%c2_44, %c4_45] : memref<3x9xf32, #tpu.memory_space<smem>>
    %95 = vector.broadcast %94 : f32 to vector<8x128xf32>
    %96 = arith.mulf %5, %95 : vector<8x128xf32>
    %97 = arith.addf %93, %96 : vector<8x128xf32>
    %c4_46 = arith.constant 4 : index
    %98 = memref.load %arg3[%c4_46] : memref<9xf32, #tpu.memory_space<smem>>
    %99 = vector.broadcast %98 : f32 to vector<8x128xf32>
    %100 = arith.addf %97, %99 : vector<8x128xf32>
    %cst_47 = arith.constant 0.000000e+00 : f32
    %101 = vector.broadcast %cst_47 : f32 to vector<8x128xf32>
    %102 = arith.maximumf %100, %101 : vector<8x128xf32>
    %c4_48 = arith.constant 4 : index
    %103 = memref.load %arg4[%c4_48] : memref<9xf32, #tpu.memory_space<smem>>
    %104 = vector.broadcast %103 : f32 to vector<8x128xf32>
    %105 = arith.mulf %102, %104 : vector<8x128xf32>
    %106 = arith.addf %86, %105 : vector<8x128xf32>
    %c0_49 = arith.constant 0 : index
    %c5 = arith.constant 5 : index
    %107 = memref.load %arg2[%c0_49, %c5] : memref<3x9xf32, #tpu.memory_space<smem>>
    %108 = vector.broadcast %107 : f32 to vector<8x128xf32>
    %109 = arith.mulf %1, %108 : vector<8x128xf32>
    %c1_50 = arith.constant 1 : index
    %c5_51 = arith.constant 5 : index
    %110 = memref.load %arg2[%c1_50, %c5_51] : memref<3x9xf32, #tpu.memory_space<smem>>
    %111 = vector.broadcast %110 : f32 to vector<8x128xf32>
    %112 = arith.mulf %3, %111 : vector<8x128xf32>
    %113 = arith.addf %109, %112 : vector<8x128xf32>
    %c2_52 = arith.constant 2 : index
    %c5_53 = arith.constant 5 : index
    %114 = memref.load %arg2[%c2_52, %c5_53] : memref<3x9xf32, #tpu.memory_space<smem>>
    %115 = vector.broadcast %114 : f32 to vector<8x128xf32>
    %116 = arith.mulf %5, %115 : vector<8x128xf32>
    %117 = arith.addf %113, %116 : vector<8x128xf32>
    %c5_54 = arith.constant 5 : index
    %118 = memref.load %arg3[%c5_54] : memref<9xf32, #tpu.memory_space<smem>>
    %119 = vector.broadcast %118 : f32 to vector<8x128xf32>
    %120 = arith.addf %117, %119 : vector<8x128xf32>
    %cst_55 = arith.constant 0.000000e+00 : f32
    %121 = vector.broadcast %cst_55 : f32 to vector<8x128xf32>
    %122 = arith.maximumf %120, %121 : vector<8x128xf32>
    %c5_56 = arith.constant 5 : index
    %123 = memref.load %arg4[%c5_56] : memref<9xf32, #tpu.memory_space<smem>>
    %124 = vector.broadcast %123 : f32 to vector<8x128xf32>
    %125 = arith.mulf %122, %124 : vector<8x128xf32>
    %126 = arith.addf %106, %125 : vector<8x128xf32>
    %c0_57 = arith.constant 0 : index
    %c6 = arith.constant 6 : index
    %127 = memref.load %arg2[%c0_57, %c6] : memref<3x9xf32, #tpu.memory_space<smem>>
    %128 = vector.broadcast %127 : f32 to vector<8x128xf32>
    %129 = arith.mulf %1, %128 : vector<8x128xf32>
    %c1_58 = arith.constant 1 : index
    %c6_59 = arith.constant 6 : index
    %130 = memref.load %arg2[%c1_58, %c6_59] : memref<3x9xf32, #tpu.memory_space<smem>>
    %131 = vector.broadcast %130 : f32 to vector<8x128xf32>
    %132 = arith.mulf %3, %131 : vector<8x128xf32>
    %133 = arith.addf %129, %132 : vector<8x128xf32>
    %c2_60 = arith.constant 2 : index
    %c6_61 = arith.constant 6 : index
    %134 = memref.load %arg2[%c2_60, %c6_61] : memref<3x9xf32, #tpu.memory_space<smem>>
    %135 = vector.broadcast %134 : f32 to vector<8x128xf32>
    %136 = arith.mulf %5, %135 : vector<8x128xf32>
    %137 = arith.addf %133, %136 : vector<8x128xf32>
    %c6_62 = arith.constant 6 : index
    %138 = memref.load %arg3[%c6_62] : memref<9xf32, #tpu.memory_space<smem>>
    %139 = vector.broadcast %138 : f32 to vector<8x128xf32>
    %140 = arith.addf %137, %139 : vector<8x128xf32>
    %cst_63 = arith.constant 0.000000e+00 : f32
    %141 = vector.broadcast %cst_63 : f32 to vector<8x128xf32>
    %142 = arith.maximumf %140, %141 : vector<8x128xf32>
    %c6_64 = arith.constant 6 : index
    %143 = memref.load %arg4[%c6_64] : memref<9xf32, #tpu.memory_space<smem>>
    %144 = vector.broadcast %143 : f32 to vector<8x128xf32>
    %145 = arith.mulf %142, %144 : vector<8x128xf32>
    %146 = arith.addf %126, %145 : vector<8x128xf32>
    %c0_65 = arith.constant 0 : index
    %c7 = arith.constant 7 : index
    %147 = memref.load %arg2[%c0_65, %c7] : memref<3x9xf32, #tpu.memory_space<smem>>
    %148 = vector.broadcast %147 : f32 to vector<8x128xf32>
    %149 = arith.mulf %1, %148 : vector<8x128xf32>
    %c1_66 = arith.constant 1 : index
    %c7_67 = arith.constant 7 : index
    %150 = memref.load %arg2[%c1_66, %c7_67] : memref<3x9xf32, #tpu.memory_space<smem>>
    %151 = vector.broadcast %150 : f32 to vector<8x128xf32>
    %152 = arith.mulf %3, %151 : vector<8x128xf32>
    %153 = arith.addf %149, %152 : vector<8x128xf32>
    %c2_68 = arith.constant 2 : index
    %c7_69 = arith.constant 7 : index
    %154 = memref.load %arg2[%c2_68, %c7_69] : memref<3x9xf32, #tpu.memory_space<smem>>
    %155 = vector.broadcast %154 : f32 to vector<8x128xf32>
    %156 = arith.mulf %5, %155 : vector<8x128xf32>
    %157 = arith.addf %153, %156 : vector<8x128xf32>
    %c7_70 = arith.constant 7 : index
    %158 = memref.load %arg3[%c7_70] : memref<9xf32, #tpu.memory_space<smem>>
    %159 = vector.broadcast %158 : f32 to vector<8x128xf32>
    %160 = arith.addf %157, %159 : vector<8x128xf32>
    %cst_71 = arith.constant 0.000000e+00 : f32
    %161 = vector.broadcast %cst_71 : f32 to vector<8x128xf32>
    %162 = arith.maximumf %160, %161 : vector<8x128xf32>
    %c7_72 = arith.constant 7 : index
    %163 = memref.load %arg4[%c7_72] : memref<9xf32, #tpu.memory_space<smem>>
    %164 = vector.broadcast %163 : f32 to vector<8x128xf32>
    %165 = arith.mulf %162, %164 : vector<8x128xf32>
    %166 = arith.addf %146, %165 : vector<8x128xf32>
    %c0_73 = arith.constant 0 : index
    %c8 = arith.constant 8 : index
    %167 = memref.load %arg2[%c0_73, %c8] : memref<3x9xf32, #tpu.memory_space<smem>>
    %168 = vector.broadcast %167 : f32 to vector<8x128xf32>
    %169 = arith.mulf %1, %168 : vector<8x128xf32>
    %c1_74 = arith.constant 1 : index
    %c8_75 = arith.constant 8 : index
    %170 = memref.load %arg2[%c1_74, %c8_75] : memref<3x9xf32, #tpu.memory_space<smem>>
    %171 = vector.broadcast %170 : f32 to vector<8x128xf32>
    %172 = arith.mulf %3, %171 : vector<8x128xf32>
    %173 = arith.addf %169, %172 : vector<8x128xf32>
    %c2_76 = arith.constant 2 : index
    %c8_77 = arith.constant 8 : index
    %174 = memref.load %arg2[%c2_76, %c8_77] : memref<3x9xf32, #tpu.memory_space<smem>>
    %175 = vector.broadcast %174 : f32 to vector<8x128xf32>
    %176 = arith.mulf %5, %175 : vector<8x128xf32>
    %177 = arith.addf %173, %176 : vector<8x128xf32>
    %c8_78 = arith.constant 8 : index
    %178 = memref.load %arg3[%c8_78] : memref<9xf32, #tpu.memory_space<smem>>
    %179 = vector.broadcast %178 : f32 to vector<8x128xf32>
    %180 = arith.addf %177, %179 : vector<8x128xf32>
    %cst_79 = arith.constant 0.000000e+00 : f32
    %181 = vector.broadcast %cst_79 : f32 to vector<8x128xf32>
    %182 = arith.maximumf %180, %181 : vector<8x128xf32>
    %c8_80 = arith.constant 8 : index
    %183 = memref.load %arg4[%c8_80] : memref<9xf32, #tpu.memory_space<smem>>
    %184 = vector.broadcast %183 : f32 to vector<8x128xf32>
    %185 = arith.mulf %182, %184 : vector<8x128xf32>
    %186 = arith.addf %166, %185 : vector<8x128xf32>
    %c0_81 = arith.constant 0 : index
    %187 = memref.load %arg5[%c0_81] : memref<1xf32, #tpu.memory_space<smem>>
    %188 = vector.broadcast %187 : f32 to vector<8x128xf32>
    %189 = arith.addf %186, %188 : vector<8x128xf32>
    %c0_82 = arith.constant 0 : index
    %c0_83 = arith.constant 0 : index
    %190 = vector.load %arg6[%c0_82, %c0_83] : memref<8x128xf32, #tpu.memory_space<vmem>>, vector<8x128xf32>
    tpu.vector_store %arg6[%c0_82, %c0_83], %189 {strides = array<i32>} : memref<8x128xf32, #tpu.memory_space<vmem>>, vector<8x128xf32>,
    return
  }
  func.func @transform_0(%arg0: i32) -> (i32, i32, i32) {
    %c0_i32 = arith.constant 0 : i32
    %c0_i32_0 = arith.constant 0 : i32
    %c0_i32_1 = arith.constant 0 : i32
    return %c0_i32, %arg0, %c0_i32_0 : i32, i32, i32
  }
  func.func @transform_1(%arg0: i32) -> (i32, i32) {
    %c0_i32 = arith.constant 0 : i32
    %c0_i32_0 = arith.constant 0 : i32
    %c0_i32_1 = arith.constant 0 : i32
    return %c0_i32, %c0_i32_0 : i32, i32
  }
  func.func @transform_2(%arg0: i32) -> i32 {
    %c0_i32 = arith.constant 0 : i32
    %c0_i32_0 = arith.constant 0 : i32
    return %c0_i32 : i32
  }
  func.func @transform_3(%arg0: i32) -> i32 {
    %c0_i32 = arith.constant 0 : i32
    %c0_i32_0 = arith.constant 0 : i32
    return %c0_i32 : i32
  }
  func.func @transform_4(%arg0: i32) -> i32 {
    %c0_i32 = arith.constant 0 : i32
    %c0_i32_0 = arith.constant 0 : i32
    return %c0_i32 : i32
  }
  func.func @transform_5(%arg0: i32) -> (i32, i32) {
    %c0_i32 = arith.constant 0 : i32
    %c0_i32_0 = arith.constant 0 : i32
    return %arg0, %c0_i32 : i32, i32
  }
}

</mosaic_0001>

<llo_original>
// kernel: tpu_custom_call.1
$region0: #{tpu_custom_call.1}
  #allocation0 [shape = 'u32[]', space=smem, size = 0x4, offset = 0x4, fixed_abs, tag = 'smem constant byte address 0x4 - core index']
  #allocation1 [shape = 'u32[144,128]{1,0:T(1,128)}', space=vmem, size = 0x12000, scoped, tag = 'internal scratch']
  #allocation2 [shape = 'f32[1]{0:T(128)S(6)}', space=smem, size = 0x200, scoped, tag = 'scoped memory for tpu_custom_call.1']
  %s0 = inlined_call_operand.hbm [shape: f32[3,8,128], index: 0, kind: input, shape index: {}]
  %s1 = inlined_call_operand.vmem [shape: f32[3,9], index: 1, kind: input, shape index: {}]
  %s2 = inlined_call_operand.vmem [shape: f32[9], index: 2, kind: input, shape index: {}]
  %s3 = inlined_call_operand.vmem [shape: f32[9], index: 3, kind: input, shape index: {}]
  %s4 = inlined_call_operand.<no memory space> [shape: f32[1], index: 4, kind: input, shape index: {}]
  %s5 = inlined_call_operand.hbm [shape: f32[8,128], index: 5, kind: output, shape index: {}]
  %s6 = sld [smem:[#allocation0]]
  $region46: #{tpu_custom_call.1} parent=0
    _
  %s8 = ssub.s32 1, %s6
  %s9 = scalar_select 0, %s8, %s6
  %10 = sst [smem:[#allocation2]] %s4
  $region1: #{tpu_custom_call.1} parent=0
    #allocation3 [shape = 'u8[12288]{0}', space=vmem, size = 0x3000, scoped, tag = 'input window, operand 0, single buffered']
    #allocation4 [shape = 's32[1]{0}', space=sflag, size = 0x4, scoped, tag = 'scoped memory for tpu_custom_call.1']
    #allocation5 [shape = 's32[1]{0}', space=sflag, size = 0x4, scoped, tag = 'scoped memory for tpu_custom_call.1']
    #allocation6 [shape = 's32[1]{0}', space=sflag, size = 0x4, scoped, tag = 'scoped memory for tpu_custom_call.1']
    #allocation7 [shape = 'u8[2048]{0}', space=smem, size = 0x800, scoped, tag = 'input window, operand 1, single buffered']
    #allocation8 [shape = 'u8[512]{0}', space=smem, size = 0x200, scoped, tag = 'input window, operand 2, single buffered']
    #allocation9 [shape = 's32[1]{0}', space=sflag, size = 0x4, scoped, tag = 'scoped memory for tpu_custom_call.1']
    #allocation10 [shape = 'u8[512]{0}', space=smem, size = 0x200, scoped, tag = 'input window, operand 3, single buffered']
    #allocation11 [shape = 'u8[4096]{0}', space=vmem, size = 0x1000, scoped, tag = 'output window, operand 0, single buffered']
    %11 = vsyncpa [#allocation4], 0
    %12 = vsyncpa [#allocation6], 0
    %13 = vsyncpa [#allocation9], 0
    %14 = vsyncpa [#allocation5], 0
    // Predicated region
    $region2: #{tpu_custom_call.1} parent=1 // pred_check
      _
    $region3: #{tpu_custom_call.1} parent=1 // pred_check_branch
      %16 = sbr.rel (0) target = $region5
    $region4: #{tpu_custom_call.1} parent=1 // pred_region
      %s18 = ssub.s32 384, 384
      %19 = vsyncadd [#allocation4], %s18
      %s20 = sshll.u32 [#allocation3], 4
      %s21 = int_to_ptr.vmem [resolvable:$true] %s20
      %26 = dma.hbm_to_vmem [thread:$0]  %s0, 384, %s21, [#allocation4], 128, 128, 8
    $region5: #{tpu_custom_call.1} parent=1 // pred_fallthru
      _
    // Predicated region
    $region6: #{tpu_custom_call.1} parent=1 // pred_check
      _
    $region7: #{tpu_custom_call.1} parent=1 // pred_check_branch
      %28 = sbr.rel (0) target = $region9
    $region8: #{tpu_custom_call.1} parent=1 // pred_region
      %s30 = ssub.s32 64, 64
      %31 = vsyncadd [#allocation6], %s30
      %s33 = sshll.u32 %s1, 4
      %s34 = int_to_ptr.vmem [resolvable:$true] %s33
      %36 = dma.vmem_to_smem %s34, 64, [#allocation7], [#allocation6]
    $region9: #{tpu_custom_call.1} parent=1 // pred_fallthru
      _
    // Predicated region
    $region10: #{tpu_custom_call.1} parent=1 // pred_check
      _
    $region11: #{tpu_custom_call.1} parent=1 // pred_check_branch
      %38 = sbr.rel (0) target = $region13
    $region12: #{tpu_custom_call.1} parent=1 // pred_region
      %s40 = ssub.s32 16, 16
      %41 = vsyncadd [#allocation9], %s40
      %s43 = sshll.u32 %s2, 4
      %s44 = int_to_ptr.vmem [resolvable:$true] %s43
      %46 = dma.vmem_to_smem %s44, 16, [#allocation8], [#allocation9]
    $region13: #{tpu_custom_call.1} parent=1 // pred_fallthru
      _
    // Predicated region
    $region14: #{tpu_custom_call.1} parent=1 // pred_check
      _
    $region15: #{tpu_custom_call.1} parent=1 // pred_check_branch
      %48 = sbr.rel (0) target = $region17
    $region16: #{tpu_custom_call.1} parent=1 // pred_region
      %s50 = ssub.s32 16, 16
      %51 = vsyncadd [#allocation9], %s50
      %s53 = sshll.u32 %s3, 4
      %s54 = int_to_ptr.vmem [resolvable:$true] %s53
      %56 = dma.vmem_to_smem %s54, 16, [#allocation10], [#allocation9]
    $region17: #{tpu_custom_call.1} parent=1 // pred_fallthru
      _
    // Predicated region
    $region18: #{tpu_custom_call.1} parent=1 // pred_check
      _
    $region19: #{tpu_custom_call.1} parent=1 // pred_check_branch
      %58 = sbr.rel (0) target = $region21
    $region20: #{tpu_custom_call.1} parent=1 // pred_region
      _
    $region21: #{tpu_custom_call.1} parent=1 // pred_fallthru
      _
    // Predicated region
    $region22: #{tpu_custom_call.1} parent=1 // pred_check
      _
    $region23: #{tpu_custom_call.1} parent=1 // pred_check_branch
      %60 = sbr.rel (0) target = $region25
    $region24: #{tpu_custom_call.1} parent=1 // pred_region
      %61 = dma.done [#allocation4], 384
    $region25: #{tpu_custom_call.1} parent=1 // pred_fallthru
      _
    // Predicated region
    $region26: #{tpu_custom_call.1} parent=1 // pred_check
      _
    $region27: #{tpu_custom_call.1} parent=1 // pred_check_branch
      %63 = sbr.rel (0) target = $region29
    $region28: #{tpu_custom_call.1} parent=1 // pred_region
      %64 = dma.done [#allocation6], 64
    $region29: #{tpu_custom_call.1} parent=1 // pred_fallthru
      _
    // Predicated region
    $region30: #{tpu_custom_call.1} parent=1 // pred_check
      _
    $region31: #{tpu_custom_call.1} parent=1 // pred_check_branch
      %66 = sbr.rel (0) target = $region33
    $region32: #{tpu_custom_call.1} parent=1 // pred_region
      %67 = dma.done [#allocation9], 16
    $region33: #{tpu_custom_call.1} parent=1 // pred_fallthru
      _
    // Predicated region
    $region34: #{tpu_custom_call.1} parent=1 // pred_check
      _
    $region35: #{tpu_custom_call.1} parent=1 // pred_check_branch
      %69 = sbr.rel (0) target = $region37
    $region36: #{tpu_custom_call.1} parent=1 // pred_region
      %70 = dma.done [#allocation9], 16
    $region37: #{tpu_custom_call.1} parent=1 // pred_fallthru
      _
    %71 = sfence
    %v72 = vld [vmem:[#allocation3] sm:$0xff]
    %s73 = scalar_lea.vmem [#allocation3], 8
    %v74 = vld [vmem:[%s73] sm:$0xff]
    %s75 = scalar_lea.vmem [#allocation3], 16
    %v76 = vld [vmem:[%s75] sm:$0xff]
    %s77 = sld [smem:[#allocation7]]
    %v78 = vstv %s77
    %v79 = vmul.f32 %v72, %v78
    %s80 = sld [smem:[#allocation7 + $0x80]]
    %v81 = vstv %s80
    %v82 = vmul.f32 %v74, %v81
    %v83 = vadd.f32 %v79, %v82
    %s84 = sld [smem:[#allocation7 + $0x100]]
    %v85 = vstv %s84
    %v86 = vmul.f32 %v76, %v85
    %v87 = vadd.f32 %v83, %v86
    %s88 = sld [smem:[#allocation8]]
    %v89 = vstv %s88
    %v90 = vadd.f32 %v87, %v89
    %v91 = vmax.f32 %v90, 0.0
    %s92 = sld [smem:[#allocation10]]
    %v93 = vstv %s92
    %v94 = vmul.f32 %v91, %v93
    %v95 = vadd.f32 %v94, 0.0
    %s96 = sld [smem:[#allocation7 + $0x1]]
    %v97 = vstv %s96
    %v98 = vmul.f32 %v72, %v97
    %s99 = sld [smem:[#allocation7 + $0x81]]
    %v100 = vstv %s99
    %v101 = vmul.f32 %v74, %v100
    %v102 = vadd.f32 %v98, %v101
    %s103 = sld [smem:[#allocation7 + $0x101]]
    %v104 = vstv %s103
    %v105 = vmul.f32 %v76, %v104
    %v106 = vadd.f32 %v102, %v105
    %s107 = sld [smem:[#allocation8 + $0x1]]
    %v108 = vstv %s107
    %v109 = vadd.f32 %v106, %v108
    %v110 = vmax.f32 %v109, 0.0
    %s111 = sld [smem:[#allocation10 + $0x1]]
    %v112 = vstv %s111
    %v113 = vmul.f32 %v110, %v112
    %v114 = vadd.f32 %v95, %v113
    %s115 = sld [smem:[#allocation7 + $0x2]]
    %v116 = vstv %s115
    %v117 = vmul.f32 %v72, %v116
    %s118 = sld [smem:[#allocation7 + $0x82]]
    %v119 = vstv %s118
    %v120 = vmul.f32 %v74, %v119
    %v121 = vadd.f32 %v117, %v120
    %s122 = sld [smem:[#allocation7 + $0x102]]
    %v123 = vstv %s122
    %v124 = vmul.f32 %v76, %v123
    %v125 = vadd.f32 %v121, %v124
    %s126 = sld [smem:[#allocation8 + $0x2]]
    %v127 = vstv %s126
    %v128 = vadd.f32 %v125, %v127
    %v129 = vmax.f32 %v128, 0.0
    %s130 = sld [smem:[#allocation10 + $0x2]]
    %v131 = vstv %s130
    %v132 = vmul.f32 %v129, %v131
    %v133 = vadd.f32 %v114, %v132
    %s134 = sld [smem:[#allocation7 + $0x3]]
    %v135 = vstv %s134
    %v136 = vmul.f32 %v72, %v135
    %s137 = sld [smem:[#allocation7 + $0x83]]
    %v138 = vstv %s137
    %v139 = vmul.f32 %v74, %v138
    %v140 = vadd.f32 %v136, %v139
    %s141 = sld [smem:[#allocation7 + $0x103]]
    %v142 = vstv %s141
    %v143 = vmul.f32 %v76, %v142
    %v144 = vadd.f32 %v140, %v143
    %s145 = sld [smem:[#allocation8 + $0x3]]
    %v146 = vstv %s145
    %v147 = vadd.f32 %v144, %v146
    %v148 = vmax.f32 %v147, 0.0
    %s149 = sld [smem:[#allocation10 + $0x3]]
    %v150 = vstv %s149
    %v151 = vmul.f32 %v148, %v150
    %v152 = vadd.f32 %v133, %v151
    %s153 = sld [smem:[#allocation7 + $0x4]]
    %v154 = vstv %s153
    %v155 = vmul.f32 %v72, %v154
    %s156 = sld [smem:[#allocation7 + $0x84]]
    %v157 = vstv %s156
    %v158 = vmul.f32 %v74, %v157
    %v159 = vadd.f32 %v155, %v158
    %s160 = sld [smem:[#allocation7 + $0x104]]
    %v161 = vstv %s160
    %v162 = vmul.f32 %v76, %v161
    %v163 = vadd.f32 %v159, %v162
    %s164 = sld [smem:[#allocation8 + $0x4]]
    %v165 = vstv %s164
    %v166 = vadd.f32 %v163, %v165
    %v167 = vmax.f32 %v166, 0.0
    %s168 = sld [smem:[#allocation10 + $0x4]]
    %v169 = vstv %s168
    %v170 = vmul.f32 %v167, %v169
    %v171 = vadd.f32 %v152, %v170
    %s172 = sld [smem:[#allocation7 + $0x5]]
    %v173 = vstv %s172
    %v174 = vmul.f32 %v72, %v173
    %s175 = sld [smem:[#allocation7 + $0x85]]
    %v176 = vstv %s175
    %v177 = vmul.f32 %v74, %v176
    %v178 = vadd.f32 %v174, %v177
    %s179 = sld [smem:[#allocation7 + $0x105]]
    %v180 = vstv %s179
    %v181 = vmul.f32 %v76, %v180
    %v182 = vadd.f32 %v178, %v181
    %s183 = sld [smem:[#allocation8 + $0x5]]
    %v184 = vstv %s183
    %v185 = vadd.f32 %v182, %v184
    %v186 = vmax.f32 %v185, 0.0
    %s187 = sld [smem:[#allocation10 + $0x5]]
    %v188 = vstv %s187
    %v189 = vmul.f32 %v186, %v188
    %v190 = vadd.f32 %v171, %v189
    %s191 = sld [smem:[#allocation7 + $0x6]]
    %v192 = vstv %s191
    %v193 = vmul.f32 %v72, %v192
    %s194 = sld [smem:[#allocation7 + $0x86]]
    %v195 = vstv %s194
    %v196 = vmul.f32 %v74, %v195
    %v197 = vadd.f32 %v193, %v196
    %s198 = sld [smem:[#allocation7 + $0x106]]
    %v199 = vstv %s198
    %v200 = vmul.f32 %v76, %v199
    %v201 = vadd.f32 %v197, %v200
    %s202 = sld [smem:[#allocation8 + $0x6]]
    %v203 = vstv %s202
    %v204 = vadd.f32 %v201, %v203
    %v205 = vmax.f32 %v204, 0.0
    %s206 = sld [smem:[#allocation10 + $0x6]]
    %v207 = vstv %s206
    %v208 = vmul.f32 %v205, %v207
    %v209 = vadd.f32 %v190, %v208
    %s210 = sld [smem:[#allocation7 + $0x7]]
    %v211 = vstv %s210
    %v212 = vmul.f32 %v72, %v211
    %s213 = sld [smem:[#allocation7 + $0x87]]
    %v214 = vstv %s213
    %v215 = vmul.f32 %v74, %v214
    %v216 = vadd.f32 %v212, %v215
    %s217 = sld [smem:[#allocation7 + $0x107]]
    %v218 = vstv %s217
    %v219 = vmul.f32 %v76, %v218
    %v220 = vadd.f32 %v216, %v219
    %s221 = sld [smem:[#allocation8 + $0x7]]
    %v222 = vstv %s221
    %v223 = vadd.f32 %v220, %v222
    %v224 = vmax.f32 %v223, 0.0
    %s225 = sld [smem:[#allocation10 + $0x7]]
    %v226 = vstv %s225
    %v227 = vmul.f32 %v224, %v226
    %v228 = vadd.f32 %v209, %v227
    %s229 = sld [smem:[#allocation7 + $0x8]]
    %v230 = vstv %s229
    %v231 = vmul.f32 %v72, %v230
    %s232 = sld [smem:[#allocation7 + $0x88]]
    %v233 = vstv %s232
    %v234 = vmul.f32 %v74, %v233
    %v235 = vadd.f32 %v231, %v234
    %s236 = sld [smem:[#allocation7 + $0x108]]
    %v237 = vstv %s236
    %v238 = vmul.f32 %v76, %v237
    %v239 = vadd.f32 %v235, %v238
    %s240 = sld [smem:[#allocation8 + $0x8]]
    %v241 = vstv %s240
    %v242 = vadd.f32 %v239, %v241
    %v243 = vmax.f32 %v242, 0.0
    %s244 = sld [smem:[#allocation10 + $0x8]]
    %v245 = vstv %s244
    %v246 = vmul.f32 %v243, %v245
    %v247 = vadd.f32 %v228, %v246
    %s248 = sld [smem:[#allocation2]]
    %v249 = vstv %s248
    %v250 = vadd.f32 %v247, %v249
    %251 = vst [vmem:[#allocation11] sm:$0xff] %v250
    // Predicated region
    $region38: #{tpu_custom_call.1} parent=1 // pred_check
      _
    $region39: #{tpu_custom_call.1} parent=1 // pred_check_branch
      %253 = sbr.rel (0) target = $region41
    $region40: #{tpu_custom_call.1} parent=1 // pred_region
      %s255 = ssub.s32 128, 128
      %256 = vsyncadd [#allocation5], %s255
      %s258 = sshll.u32 [#allocation11], 4
      %s259 = int_to_ptr.vmem [resolvable:$true] %s258
      %261 = dma.vmem_to_hbm [thread:$0]  %s259, 128, %s5, [#allocation5]
    $region41: #{tpu_custom_call.1} parent=1 // pred_fallthru
      _
    // Predicated region
    $region42: #{tpu_custom_call.1} parent=1 // pred_check
      _
    $region43: #{tpu_custom_call.1} parent=1 // pred_check_branch
      %263 = sbr.rel (0) target = $region45
    $region44: #{tpu_custom_call.1} parent=1 // pred_region
      %264 = dma.done [#allocation5], 128
    $region45: #{tpu_custom_call.1} parent=1 // pred_fallthru
      _
    %265 = vsyncpa [#allocation4], 1
    %266 = vsyncpa [#allocation5], 1
    %267 = vsyncpa [#allocation6], 1
    %268 = vsyncpa [#allocation9], 1

</llo_original>
